<compile_context>
chip_gen: v6e
topology: v6e:2x2x1
jax: 0.10.0
libtpu: 0.0.40
codegen_flags: <defaults>
</compile_context>

<pallas_src>
import math
import functools

import jax
import jax.numpy as jnp
from jax import lax
from jax.experimental import pallas as pl
from jax.experimental.pallas import tpu as pltpu

VMEM_LIMIT_BYTES = 32 * 1024 * 1024  # explicit scoped-VMEM cap (<= physical on v5e/v6e/v7x)


# ----------------------------- tiled linear  y = x @ w + b -----------------------------

def _matmul_bias_kernel(x_ref, w_ref, b_ref, o_ref, acc_ref):
    @pl.when(pl.program_id(2) == 0)
    def _init():
        acc_ref[...] = jnp.zeros_like(acc_ref)

    acc_ref[...] += jnp.dot(x_ref[...], w_ref[...],
                            preferred_element_type=jnp.float32)

    @pl.when(pl.program_id(2) == pl.num_programs(2) - 1)
    def _finalize():
        o_ref[...] = (acc_ref[...] + b_ref[...].astype(jnp.float32)).astype(o_ref.dtype)


def _fit_tile(dim, target, align):
    """Largest tile <= target that divides dim (power-of-two steps), else the full dim."""
    if dim <= target:
        return dim
    t = target
    while t >= align:
        if dim % t == 0:
            return t
        t //= 2
    return dim


def pallas_matmul(x, w, b=None, *, out_dtype=jnp.float32, tm=256, tn=256, tk=512):
    """Tiled, pipelined Pallas matmul with f32 accumulation and fused bias add."""
    M, K = x.shape
    K2, N = w.shape
    assert K == K2
    if b is None:
        b = jnp.zeros((1, N), jnp.float32)
    bm = _fit_tile(M, tm, 8)
    bn = _fit_tile(N, tn, 128)
    bk = _fit_tile(K, tk, 128)
    grid = (M // bm, N // bn, K // bk)
    return pl.pallas_call(
        _matmul_bias_kernel,
        out_shape=jax.ShapeDtypeStruct((M, N), out_dtype),
        grid=grid,
        in_specs=[pl.BlockSpec((bm, bk), lambda i, j, k: (i, k)),
                  pl.BlockSpec((bk, bn), lambda i, j, k: (k, j)),
                  pl.BlockSpec((1, bn), lambda i, j, k: (0, j))],
        out_specs=pl.BlockSpec((bm, bn), lambda i, j, k: (i, j)),
        scratch_shapes=[pltpu.VMEM((bm, bn), jnp.float32)],
        compiler_params=pltpu.CompilerParams(
            dimension_semantics=("parallel", "parallel", "arbitrary"),
            vmem_limit_bytes=VMEM_LIMIT_BYTES),
    )(x, w, b)


# ----------------------------- rel-pos attention kernel -----------------------------

def _rel_attn_kernel(q_ref, k_ref, v_ref, p_ref, ub_ref, vb_ref, o_ref, *rest,
                     inv_sqrt_dim, approx_recip, return_attn):
    a_ref = rest[0] if return_attn else None
    _, H, T, Dh = q_ref.shape
    W = p_ref.shape[1]            # = 2T  (reversed rel-PE table, padded by one zero row)
    cdt = q_ref.dtype             # MXU operand dtype (f32 or bf16)

    q = q_ref[0]                  # [H, T, Dh]
    k = k_ref[0]                  # [H, T, Dh]
    v = v_ref[0]                  # [H, T, Dh]
    p = p_ref[...]                # [H, W, Dh]
    ub = ub_ref[...].astype(jnp.float32)   # [H, Dh]
    vb = vb_ref[...].astype(jnp.float32)   # [H, Dh]

    # Fold the u/v bias adds and the 1/sqrt(d_model) scale into the (small) queries.
    qf = q.astype(jnp.float32)
    qu = ((qf + ub[:, None, :]) * inv_sqrt_dim).astype(cdt)     # content query
    qv = ((qf + vb[:, None, :]) * inv_sqrt_dim).astype(cdt)     # position query

    # content score: (q + u_bias) @ k^T, batched over heads (MXU)
    content = jnp.einsum('hid,hjd->hij', qu, k,
                         preferred_element_type=jnp.float32)                 # [H, T, T]

    # positional score via the Transformer-XL relative shift:
    #   bd[h, i, c]  = (q + v_bias)[h, i, :] . P_rev[h, c, :]                (MXU)
    #   pos[h, i, j] = bd[h, i, (T - 1 - i) + j]                             (barrel shift)
    bd = jnp.einsum('hid,hcd->hic', qv, p,
                    preferred_element_type=jnp.float32)                      # [H, T, W]
    shift = (T - 1) - lax.broadcasted_iota(jnp.int32, (H, T, W), 1)          # per-row shift
    x = bd
    amt = 1
    while amt < T:                # ceil(log2(T)) static stages of slice+concat+select
        rolled = jnp.concatenate([x[:, :, amt:], x[:, :, :amt]], axis=-1)    # circular left by amt
        x = jnp.where((shift & amt) != 0, rolled, x)
        amt <<= 1
    pos = x[:, :, :T]                                                        # [H, T, T]

    score = content + pos                       # already scaled by 1/sqrt(d_model)
    score = score - jnp.max(score, axis=-1, keepdims=True)                   # stable softmax (f32)
    e = jnp.exp(score)
    denom = jnp.sum(e, axis=-1, keepdims=True)
    attn = e * pl.reciprocal(denom, approx=approx_recip)                     # [H, T, T]

    out = jnp.einsum('hij,hjd->hid', attn.astype(cdt), v,
                     preferred_element_type=jnp.float32)                     # [H, T, Dh]

    o_ref[0] = out.astype(o_ref.dtype)
    if return_attn:
        a_ref[0] = attn.astype(a_ref.dtype)


def pallas_rel_attention(q, k, v, p_rev, u_bias, v_bias, *,
                         inv_sqrt_dim, compute_dtype, return_attn=True):
    B, H, T, Dh = q.shape
    W = p_rev.shape[1]
    kernel = functools.partial(
        _rel_attn_kernel,
        inv_sqrt_dim=inv_sqrt_dim,
        approx_recip=(compute_dtype != jnp.float32),
        return_attn=return_attn)

    out_shape = [jax.ShapeDtypeStruct((B, H, T, Dh), compute_dtype)]
    out_specs = [pl.BlockSpec((1, H, T, Dh), lambda b: (b, 0, 0, 0))]
    if return_attn:
        out_shape.append(jax.ShapeDtypeStruct((B, H, T, T), jnp.float32))
        out_specs.append(pl.BlockSpec((1, H, T, T), lambda b: (b, 0, 0, 0)))

    res = pl.pallas_call(
        kernel,
        out_shape=tuple(out_shape),
        grid=(B,),
        in_specs=[pl.BlockSpec((1, H, T, Dh), lambda b: (b, 0, 0, 0)),  # q
                  pl.BlockSpec((1, H, T, Dh), lambda b: (b, 0, 0, 0)),  # k
                  pl.BlockSpec((1, H, T, Dh), lambda b: (b, 0, 0, 0)),  # v
                  pl.BlockSpec((H, W, Dh), lambda b: (0, 0, 0)),        # rel-PE (VMEM resident)
                  pl.BlockSpec((H, Dh), lambda b: (0, 0)),              # u_bias
                  pl.BlockSpec((H, Dh), lambda b: (0, 0))],             # v_bias
        out_specs=tuple(out_specs),
        compiler_params=pltpu.CompilerParams(
            dimension_semantics=("parallel",),
            vmem_limit_bytes=VMEM_LIMIT_BYTES),
    )(q.astype(compute_dtype), k.astype(compute_dtype), v.astype(compute_dtype),
      p_rev.astype(compute_dtype),
      u_bias.astype(jnp.float32), v_bias.astype(jnp.float32))

    if return_attn:
        return res[0], res[1]
    return res[0], None


# ----------------------------- JAX glue -----------------------------

def rel_pos_encoding(T, D):
    """Sinusoidal encodings for relative positions -(T-1)..(T-1) -> [2T-1, D]."""
    positions = jnp.arange(-(T - 1), T, dtype=jnp.float32)[:, None]           # [2T-1, 1]
    denominator = jnp.exp(jnp.arange(0, D, 2, dtype=jnp.float32)
                          * -(math.log(10000.0) / D))                          # [D//2]
    pe = jnp.zeros((2 * T - 1, D), jnp.float32)
    pe = pe.at[:, 0::2].set(jnp.sin(positions * denominator))
    pe = pe.at[:, 1::2].set(jnp.cos(positions * denominator))
    return pe


def init_params(key, D, H):
    """Parameter init mirroring the PyTorch module (xavier weights, zero biases)."""
    Dh = D // H
    ks = jax.random.split(key, 7)

    def xavier(k, shape, fan_in, fan_out):
        bound = math.sqrt(6.0 / (fan_in + fan_out))
        return jax.random.uniform(k, shape, jnp.float32, -bound, bound)

    zeros_b = jnp.zeros((1, D), jnp.float32)
    return dict(
        num_heads=H,
        wq=xavier(ks[0], (D, D), D, D), bq=zeros_b,
        wk=xavier(ks[1], (D, D), D, D), bk=zeros_b,
        wv=xavier(ks[2], (D, D), D, D), bv=zeros_b,
        wp=xavier(ks[3], (D, D), D, D),            # pos_proj, no bias
        wo=xavier(ks[4], (D, D), D, D), bo=zeros_b,
        u_bias=xavier(ks[5], (H, Dh), Dh, H),
        v_bias=xavier(ks[6], (H, Dh), Dh, H),
    )


def rel_mha_forward(params, query, key=None, value=None, *,
                    compute_dtype=jnp.float32, return_attn=True):
    """Forward pass.  compute_dtype=jnp.bfloat16 runs all MXU matmuls in bf16 (f32 accumulation,
    f32 softmax) -- recommended on v6e / v7x.  Returns (out [B,T,D] f32, attn [B,H,T,T] f32|None)."""
    if key is None:
        key = query
    if value is None:
        value = query
    B, T, D = value.shape
    H = params["num_heads"]
    Dh = D // H
    inv_sqrt_dim = 1.0 / math.sqrt(D)   # module scales by sqrt(d_model), not sqrt(d_head)
    cdt = compute_dtype

    # --- fused q/k/v projection: one [B*T, D] @ [D, 3D] tiled matmul ------------------------
    if key is query and value is query:
        w_qkv = jnp.concatenate([params["wq"], params["wk"], params["wv"]], axis=1).astype(cdt)
        b_qkv = jnp.concatenate([params["bq"], params["bk"], params["bv"]], axis=1)
        qkv = pallas_matmul(query.reshape(B * T, D).astype(cdt), w_qkv, b_qkv, out_dtype=cdt)
        q, k, v = qkv[:, :D], qkv[:, D:2 * D], qkv[:, 2 * D:]
    else:
        q = pallas_matmul(query.reshape(-1, D).astype(cdt), params["wq"].astype(cdt),
                          params["bq"], out_dtype=cdt)
        k = pallas_matmul(key.reshape(-1, D).astype(cdt), params["wk"].astype(cdt),
                          params["bk"], out_dtype=cdt)
        v = pallas_matmul(value.reshape(-1, D).astype(cdt), params["wv"].astype(cdt),
                          params["bv"], out_dtype=cdt)

    q = q.reshape(B, T, H, Dh).transpose(0, 2, 1, 3)   # [B, H, T, Dh]
    k = k.reshape(B, T, H, Dh).transpose(0, 2, 1, 3)
    v = v.reshape(B, T, H, Dh).transpose(0, 2, 1, 3)

    # --- projected relative positional table (small: [2T-1, D]) ------------------------------
    pe = rel_pos_encoding(T, D)
    pe_proj = pallas_matmul(pe.astype(cdt), params["wp"].astype(cdt), None,
                            out_dtype=jnp.float32)                                  # [2T-1, D]
    # Reverse the relative-position axis (row c <-> relative position T-1-c), split heads,
    # pad with one zero row to even width W = 2T  -> [H, 2T, Dh]  (tiny; resident in VMEM).
    p_rev = pe_proj[::-1].reshape(2 * T - 1, H, Dh).transpose(1, 0, 2)
    p_rev = jnp.concatenate([p_rev, jnp.zeros((H, 1, Dh), p_rev.dtype)], axis=1)

    out_bhtd, attn = pallas_rel_attention(
        q, k, v, p_rev, params["u_bias"], params["v_bias"],
        inv_sqrt_dim=inv_sqrt_dim, compute_dtype=cdt, return_attn=return_attn)

    # --- output projection --------------------------------------------------------------------
    out = out_bhtd.transpose(0, 2, 1, 3).reshape(B * T, D)
    out = pallas_matmul(out.astype(cdt), params["wo"].astype(cdt), params["bo"],
                        out_dtype=jnp.float32).reshape(B, T, D)
    return out, attn


# ----------------------------- pure-JAX reference (correctness check) -----------------------------

def rel_mha_reference(params, query):
    B, T, D = query.shape
    H = params["num_heads"]
    Dh = D // H
    sqrt_dim = math.sqrt(D)

    def lin(x, w, b):
        return x @ w + b[0]

    q = lin(query, params["wq"], params["bq"]).reshape(B, T, H, Dh)
    k = lin(query, params["wk"], params["bk"]).reshape(B, T, H, Dh).transpose(0, 2, 1, 3)
    v = lin(query, params["wv"], params["bv"]).reshape(B, T, H, Dh).transpose(0, 2, 1, 3)

    pe_proj = rel_pos_encoding(T, D) @ params["wp"]
    idx = jnp.arange(T)[:, None] - jnp.arange(T)[None, :] + (T - 1)
    pg = pe_proj[idx].reshape(T, T, H, Dh)

    content = jnp.einsum("bihd,bhjd->bhij", q + params["u_bias"], k)
    pos = jnp.einsum("bihd,ijhd->bhij", q + params["v_bias"], pg)
    score = (content + pos) / sqrt_dim
    attn = jax.nn.softmax(score, axis=-1)
    out = jnp.einsum("bhij,bhjd->bihd", attn, v).reshape(B, T, D)
    out = lin(out, params["wo"], params["bo"])
    return out, attn


# ----------------------------- main -----------------------------

if __name__ == "__main__":
    B, T, D, H = 2, 8, 32, 4
    root = jax.random.PRNGKey(0)
    kx, kp = jax.random.split(root)

    x = jax.random.normal(kx, (B, T, D), jnp.float32)
    params = init_params(kp, D, H)

    ref_out, ref_attn = rel_mha_reference(params, x)

    # f32 path: tight numerical check against the pure-JAX reference.
    out32, attn32 = jax.block_until_ready(
        rel_mha_forward(params, x, compute_dtype=jnp.float32))
    assert out32.shape == (B, T, D) and attn32.shape == (B, H, T, T)
    assert jnp.allclose(out32, ref_out, atol=5e-3, rtol=5e-3)
    assert jnp.allclose(attn32, ref_attn, atol=5e-3, rtol=5e-3)

    # bf16 MXU path (recommended on v6e/v7x): looser tolerance vs the f32 reference.
    outbf, attnbf = jax.block_until_ready(
        rel_mha_forward(params, x, compute_dtype=jnp.bfloat16))
    assert outbf.shape == (B, T, D) and attnbf.shape == (B, H, T, T)
    assert jnp.allclose(outbf, ref_out, atol=5e-2, rtol=5e-2)
    assert jnp.allclose(attnbf, ref_attn, atol=5e-2, rtol=5e-2)

    print("KERNEL_OK")
</pallas_src>

<mosaic_0001>
module attributes {stable_mosaic.version = 11 : i64} {
  func.func @_matmul_bias_kernel(%arg0: i32, %arg1: i32, %arg2: i32, %arg3: memref<16x32xf32, #tpu.memory_space<vmem>>, %arg4: memref<32x96xf32, #tpu.memory_space<vmem>>, %arg5: memref<1x96xf32, #tpu.memory_space<vmem>>, %arg6: memref<16x96xf32, #tpu.memory_space<vmem>>, %arg7: memref<16x96xf32, #tpu.memory_space<vmem>>) attributes {dimension_semantics = [#tpu.dimension_semantics<parallel>, #tpu.dimension_semantics<parallel>, #tpu.dimension_semantics<arbitrary>], iteration_bounds = array<i64: 1, 1, 1>, scalar_prefetch = 0 : i64, scratch_operands = 1 : i64, tpu.core_type = #tpu.core_type<tc>, window_params = [{transform_indices = @transform_0, window_bounds = array<i64: 16, 32>}, {transform_indices = @transform_1, window_bounds = array<i64: 32, 96>}, {transform_indices = @transform_2, window_bounds = array<i64: 1, 96>}, {transform_indices = @transform_3, window_bounds = array<i64: 16, 96>}]} {
    %c0_i32 = arith.constant 0 : i32
    %0 = arith.cmpi eq, %arg2, %c0_i32 : i32
    %1 = arith.extui %0 : i1 to i32
    %c0_i32_0 = arith.constant 0 : i32
    %2 = arith.cmpi ne, %1, %c0_i32_0 : i32
    scf.if %2 {
      %cst_10 = arith.constant 0.000000e+00 : f32
      %12 = vector.broadcast %cst_10 : f32 to vector<16x96xf32>
      %c0_11 = arith.constant 0 : index
      %c0_12 = arith.constant 0 : index
      %13 = vector.load %arg7[%c0_11, %c0_12] : memref<16x96xf32, #tpu.memory_space<vmem>>, vector<16x96xf32>
      tpu.vector_store %arg7[%c0_11, %c0_12], %12 {strides = array<i32>} : memref<16x96xf32, #tpu.memory_space<vmem>>, vector<16x96xf32>,
    } else {
    }
    %c0 = arith.constant 0 : index
    %c0_1 = arith.constant 0 : index
    %3 = vector.load %arg7[%c0, %c0_1] : memref<16x96xf32, #tpu.memory_space<vmem>>, vector<16x96xf32>
    %c0_2 = arith.constant 0 : index
    %c0_3 = arith.constant 0 : index
    %4 = vector.load %arg3[%c0_2, %c0_3] : memref<16x32xf32, #tpu.memory_space<vmem>>, vector<16x32xf32>
    %c0_4 = arith.constant 0 : index
    %c0_5 = arith.constant 0 : index
    %5 = vector.load %arg4[%c0_4, %c0_5] : memref<32x96xf32, #tpu.memory_space<vmem>>, vector<32x96xf32>
    %cst = arith.constant dense<0.000000e+00> : vector<16x96xf32>
    %6 = tpu.matmul %4, %5, %cst {dimension_numbers = #tpu.dot_dimension_numbers<[1], [0], [0], [1], [0, 0, 1, 1], [], []>} : vector<16x32xf32>, vector<32x96xf32>, vector<16x96xf32> -> vector<16x96xf32>
    %7 = arith.addf %3, %6 : vector<16x96xf32>
    %c0_6 = arith.constant 0 : index
    %c0_7 = arith.constant 0 : index
    %8 = vector.load %arg7[%c0_6, %c0_7] : memref<16x96xf32, #tpu.memory_space<vmem>>, vector<16x96xf32>
    tpu.vector_store %arg7[%c0_6, %c0_7], %7 {strides = array<i32>} : memref<16x96xf32, #tpu.memory_space<vmem>>, vector<16x96xf32>,
    %c0_i32_8 = arith.constant 0 : i32
    %9 = arith.cmpi eq, %arg2, %c0_i32_8 : i32
    %10 = arith.extui %9 : i1 to i32
    %c0_i32_9 = arith.constant 0 : i32
    %11 = arith.cmpi ne, %10, %c0_i32_9 : i32
    scf.if %11 {
      %c0_10 = arith.constant 0 : index
      %c0_11 = arith.constant 0 : index
      %12 = vector.load %arg7[%c0_10, %c0_11] : memref<16x96xf32, #tpu.memory_space<vmem>>, vector<16x96xf32>
      %c0_12 = arith.constant 0 : index
      %c0_13 = arith.constant 0 : index
      %13 = vector.load %arg5[%c0_12, %c0_13] : memref<1x96xf32, #tpu.memory_space<vmem>>, vector<1x96xf32>
      %14 = vector.broadcast %13 : vector<1x96xf32> to vector<16x96xf32>
      %15 = arith.addf %12, %14 : vector<16x96xf32>
      %c0_14 = arith.constant 0 : index
      %c0_15 = arith.constant 0 : index
      %16 = vector.load %arg6[%c0_14, %c0_15] : memref<16x96xf32, #tpu.memory_space<vmem>>, vector<16x96xf32>
      tpu.vector_store %arg6[%c0_14, %c0_15], %15 {strides = array<i32>} : memref<16x96xf32, #tpu.memory_space<vmem>>, vector<16x96xf32>,
    } else {
    }
    return
  }
  func.func @transform_0(%arg0: i32, %arg1: i32, %arg2: i32) -> (i32, i32) {
    %c0_i32 = arith.constant 0 : i32
    return %arg0, %arg2 : i32, i32
  }
  func.func @transform_1(%arg0: i32, %arg1: i32, %arg2: i32) -> (i32, i32) {
    %c0_i32 = arith.constant 0 : i32
    return %arg2, %arg1 : i32, i32
  }
  func.func @transform_2(%arg0: i32, %arg1: i32, %arg2: i32) -> (i32, i32) {
    %c0_i32 = arith.constant 0 : i32
    %c0_i32_0 = arith.constant 0 : i32
    return %c0_i32, %arg1 : i32, i32
  }
  func.func @transform_3(%arg0: i32, %arg1: i32, %arg2: i32) -> (i32, i32) {
    %c0_i32 = arith.constant 0 : i32
    return %arg0, %arg1 : i32, i32
  }
}

</mosaic_0001>

<llo_original>
// kernel: tpu_custom_call.1
$region0: #{tpu_custom_call.1}
  #allocation0 [shape = 'u32[]', space=smem, size = 0x4, offset = 0x4, fixed_abs, tag = 'smem constant byte address 0x4 - core index']
  #allocation1 [shape = 'u32[144,128]{1,0:T(1,128)}', space=vmem, size = 0x12000, scoped, tag = 'internal scratch']
  #allocation2 [shape = 'f32[16,96]{1,0:T(8,128)}', space=vmem, size = 0x2000, scoped, tag = 'scratch operand']
  %s0 = inlined_call_operand.hbm [shape: f32[16,32], index: 0, kind: input, shape index: {}]
  %s1 = inlined_call_operand.hbm [shape: f32[32,96], index: 1, kind: input, shape index: {}]
  %s2 = inlined_call_operand.vmem [shape: f32[1,96], index: 2, kind: input, shape index: {}]
  %s3 = inlined_call_operand.hbm [shape: f32[16,96], index: 3, kind: output, shape index: {}]
  %s4 = sld [smem:[#allocation0]]
  $region38: #{tpu_custom_call.1} parent=0
    _
  %s6 = ssub.s32 1, %s4
  %s7 = scalar_select 0, %s6, %s4
  $region1: #{tpu_custom_call.1} parent=0
    #allocation3 [shape = 'u8[8192]{0}', space=vmem, size = 0x2000, scoped, tag = 'input window, operand 0, single buffered']
    #allocation4 [shape = 's32[1]{0}', space=sflag, size = 0x4, scoped, tag = 'scoped memory for tpu_custom_call.1']
    #allocation5 [shape = 's32[1]{0}', space=sflag, size = 0x4, scoped, tag = 'scoped memory for tpu_custom_call.1']
    #allocation6 [shape = 'u8[16384]{0}', space=vmem, size = 0x4000, scoped, tag = 'input window, operand 1, single buffered']
    #allocation7 [shape = 's32[1]{0}', space=sflag, size = 0x4, scoped, tag = 'scoped memory for tpu_custom_call.1']
    #allocation8 [shape = 'u8[8192]{0}', space=vmem, size = 0x2000, scoped, tag = 'output window, operand 0, single buffered']
    %8 = vsyncpa [#allocation4], 0
    %9 = vsyncpa [#allocation7], 0
    %10 = vsyncpa [#allocation5], 0
    // Predicated region
    $region2: #{tpu_custom_call.1} parent=1 // pred_check
      _
    $region3: #{tpu_custom_call.1} parent=1 // pred_check_branch
      %12 = sbr.rel (0) target = $region5
    $region4: #{tpu_custom_call.1} parent=1 // pred_region
      %s14 = ssub.s32 256, 256
      %15 = vsyncadd [#allocation4], %s14
      %s16 = sshll.u32 [#allocation3], 4
      %s17 = int_to_ptr.vmem [resolvable:$true] %s16
      %22 = dma.hbm_to_vmem [thread:$0]  %s0, 256, %s17, [#allocation4], 128, 128, 8
    $region5: #{tpu_custom_call.1} parent=1 // pred_fallthru
      _
    // Predicated region
    $region6: #{tpu_custom_call.1} parent=1 // pred_check
      _
    $region7: #{tpu_custom_call.1} parent=1 // pred_check_branch
      %24 = sbr.rel (0) target = $region9
    $region8: #{tpu_custom_call.1} parent=1 // pred_region
      %s26 = ssub.s32 512, 512
      %27 = vsyncadd [#allocation7], %s26
      %s28 = sshll.u32 [#allocation6], 4
      %s29 = int_to_ptr.vmem [resolvable:$true] %s28
      %34 = dma.hbm_to_vmem [thread:$0]  %s1, 512, %s29, [#allocation7], 128, 128, 8
    $region9: #{tpu_custom_call.1} parent=1 // pred_fallthru
      _
    // Predicated region
    $region10: #{tpu_custom_call.1} parent=1 // pred_check
      _
    $region11: #{tpu_custom_call.1} parent=1 // pred_check_branch
      %36 = sbr.rel (0) target = $region13
    $region12: #{tpu_custom_call.1} parent=1 // pred_region
      _
    $region13: #{tpu_custom_call.1} parent=1 // pred_fallthru
      _
    // Predicated region
    $region14: #{tpu_custom_call.1} parent=1 // pred_check
      _
    $region15: #{tpu_custom_call.1} parent=1 // pred_check_branch
      %38 = sbr.rel (0) target = $region17
    $region16: #{tpu_custom_call.1} parent=1 // pred_region
      %39 = dma.done [#allocation4], 256
    $region17: #{tpu_custom_call.1} parent=1 // pred_fallthru
      _
    // Predicated region
    $region18: #{tpu_custom_call.1} parent=1 // pred_check
      _
    $region19: #{tpu_custom_call.1} parent=1 // pred_check_branch
      %41 = sbr.rel (0) target = $region21
    $region20: #{tpu_custom_call.1} parent=1 // pred_region
      %42 = dma.done [#allocation7], 512
    $region21: #{tpu_custom_call.1} parent=1 // pred_fallthru
      _
    %p43 = scmp.eq.s32.totalorder 0, 0
    // Predicated region
    $region22: #{tpu_custom_call.1} parent=1 // pred_check
      %p44 = pneg %p43
    $region23: #{tpu_custom_call.1} parent=1 // pred_check_branch
      %46 = sbr.rel (%p44) target = $region25
    $region24: #{tpu_custom_call.1} parent=1 // pred_region
      %vm47 = vcmask 785408
      %48 = vst.msk [vmem:[#allocation2] sm:$0xff] %vm47, 0.0
      %49 = vst.msk [vmem:[#allocation2 + $0x8] sm:$0xff] %vm47, 0.0
    $region25: #{tpu_custom_call.1} parent=1 // pred_fallthru
      _
    %v50 = vld [vmem:[#allocation2] sm:$0xff]
    %v51 = vld [vmem:[#allocation2 + $0x8] sm:$0xff]
    %v52 = vld [vmem:[#allocation3] sm:$0xff]
    %v53 = vld [vmem:[#allocation3 + $0x8] sm:$0xff]
    %v54 = vld [vmem:[#allocation6] sm:$0xff]
    %v55 = vld [vmem:[#allocation6 + $0x8] sm:$0xff]
    %v56 = vld [vmem:[#allocation6 + $0x10] sm:$0xff]
    %v57 = vld [vmem:[#allocation6 + $0x18] sm:$0xff]
    %vm58 = vcmask 261120
    %v60 = vsel %vm58, %v52, 0
    %v63 = vsel %vm58, %v53, 0
    %65 = vmatprep.subr.mxu0 0.0
    %66 = vmatpush1.msra.mxu0 0.0
    %67 = vmatprep.subr.mxu0 0.0
    %68 = vmatpush1.msra.mxu0 0.0
    %69 = vmatprep.subr.mxu0 0.0
    %70 = vmatpush1.msra.mxu0 0.0
    %71 = vmatprep.subr.mxu0 0.0
    %72 = vmatpush1.msra.mxu0 0.0
    %73 = vmatprep.subr.mxu0 0.0
    %74 = vmatpush1.msra.mxu0 0.0
    %75 = vmatprep.subr.mxu0 0.0
    %76 = vmatpush1.msra.mxu0 0.0
    %77 = vmatprep.subr.mxu0 0.0
    %78 = vmatpush1.msra.mxu0 0.0
    %79 = vmatprep.subr.mxu0 0.0
    %80 = vmatpush1.msra.mxu0 0.0
    %81 = vmatprep.subr.mxu0 0.0
    %82 = vmatpush1.msra.mxu0 0.0
    %83 = vmatprep.subr.mxu0 0.0
    %84 = vmatpush1.msra.mxu0 0.0
    %85 = vmatprep.subr.mxu0 0.0
    %86 = vmatpush1.msra.mxu0 0.0
    %87 = vmatprep.subr.mxu0 0.0
    %88 = vmatpush1.msra.mxu0 0.0
    %89 = vmatprep.subr.mxu0 0.0
    %90 = vmatpush1.msra.mxu0 %v57
    %91 = vmatprep.subr.mxu0 0.0
    %92 = vmatpush1.msra.mxu0 %v56
    %93 = vmatprep.subr.mxu0 0.0
    %94 = vmatpush1.msra.mxu0 %v55
    %95 = vmatprep.subr.mxu0 0.0
    %96 = vmatpush1.msra.mxu0 %v54
    %97 = vmatprep.subr.mxu0 0.0
    %98 = vmatpush2.msra.mxu0 0.0
    %99 = vmatprep.subr.mxu0 0.0
    %100 = vmatpush2.msra.mxu0 0.0
    %101 = vmatprep.subr.mxu0 0.0
    %102 = vmatpush2.msra.mxu0 0.0
    %103 = vmatprep.subr.mxu0 0.0
    %104 = vmatpush2.msra.mxu0 0.0
    %105 = vmatprep.subr.mxu0 0.0
    %106 = vmatpush2.msra.mxu0 0.0
    %107 = vmatprep.subr.mxu0 0.0
    %108 = vmatpush2.msra.mxu0 0.0
    %109 = vmatprep.subr.mxu0 0.0
    %110 = vmatpush2.msra.mxu0 0.0
    %111 = vmatprep.subr.mxu0 0.0
    %112 = vmatpush2.msra.mxu0 0.0
    %113 = vmatprep.subr.mxu0 0.0
    %114 = vmatpush2.msra.mxu0 0.0
    %115 = vmatprep.subr.mxu0 0.0
    %116 = vmatpush2.msra.mxu0 0.0
    %117 = vmatprep.subr.mxu0 0.0
    %118 = vmatpush2.msra.mxu0 0.0
    %119 = vmatprep.subr.mxu0 0.0
    %120 = vmatpush2.msra.mxu0 0.0
    %121 = vmatprep.subr.mxu0 0.0
    %122 = vmatpush2.msra.mxu0 0.0
    %123 = vmatprep.subr.mxu0 0.0
    %124 = vmatpush2.msra.mxu0 0.0
    %125 = vmatprep.subr.mxu0 0.0
    %126 = vmatpush2.msra.mxu0 0.0
    %127 = vmatprep.subr.mxu0 0.0
    %128 = vmatpush2.msra.mxu0 0.0
    %129 = vmatprep.mubr.f32.mxu0 0.0
    %130 = vmatmul.mubr.f32.gmra.mxu0 %v60
    %v131 = vpop.f32.mrf.mxu0
    %v132 = vadd.f32 0.0, %v131
    %v133 = vpop.f32.mrf.mxu0
    %134 = vmatprep.mubr.f32.mxu0 0.0
    %135 = vmatmul.mubr.f32.gmra.mxu0 %v63
    %v136 = vpop.f32.mrf.mxu0
    %v137 = vadd.f32 0.0, %v136
    %v138 = vpop.f32.mrf.mxu0
    %139 = vdwg.mxu0
    %v140 = vadd.f32 %v50, %v132
    %v141 = vadd.f32 %v51, %v137
    %vm142 = vcmask 785408
    %143 = vst.msk [vmem:[#allocation2] sm:$0xff] %vm142, %v140
    %144 = vst.msk [vmem:[#allocation2 + $0x8] sm:$0xff] %vm142, %v141
    // Predicated region
    $region26: #{tpu_custom_call.1} parent=1 // pred_check
      %p145 = pneg %p43
    $region27: #{tpu_custom_call.1} parent=1 // pred_check_branch
      %147 = sbr.rel (%p145) target = $region29
    $region28: #{tpu_custom_call.1} parent=1 // pred_region
      %v148 = vld [vmem:[#allocation2] sm:$0xff]
      %v149 = vld [vmem:[#allocation2 + $0x8] sm:$0xff]
      %v150 = vld [vmem:[%s2] sm:$0x1]
      %v152 = vlaneseq
      %v153 = vshrl.u32 %v152, 7
      %v154 = vsub.s32 0, %v153
      %v155 = vrot.slane %v150, %v154
      %v157 = vadd.f32 %v148, %v155
      %v158 = vadd.f32 %v149, %v155
      %159 = vst.msk [vmem:[#allocation8] sm:$0xff] %vm142, %v157
      %160 = vst.msk [vmem:[#allocation8 + $0x8] sm:$0xff] %vm142, %v158
    $region29: #{tpu_custom_call.1} parent=1 // pred_fallthru
      _
    // Predicated region
    $region30: #{tpu_custom_call.1} parent=1 // pred_check
      _
    $region31: #{tpu_custom_call.1} parent=1 // pred_check_branch
      %162 = sbr.rel (0) target = $region33
    $region32: #{tpu_custom_call.1} parent=1 // pred_region
      %s164 = ssub.s32 256, 256
      %165 = vsyncadd [#allocation5], %s164
      %s166 = sshll.u32 [#allocation8], 4
      %s167 = int_to_ptr.vmem [resolvable:$true] %s166
      %172 = dma.vmem_to_hbm [thread:$0]  %s167, 256, %s3, [#allocation5], 128, 128, 8
    $region33: #{tpu_custom_call.1} parent=1 // pred_fallthru
      _
    // Predicated region
    $region34: #{tpu_custom_call.1} parent=1 // pred_check
      _
    $region35: #{tpu_custom_call.1} parent=1 // pred_check_branch
      %174 = sbr.rel (0) target = $region37
    $region36: #{tpu_custom_call.1} parent=1 // pred_region
      %175 = dma.done [#allocation5], 256
    $region37: #{tpu_custom_call.1} parent=1 // pred_fallthru
      _
    %176 = vsyncpa [#allocation4], 1
    %177 = vsyncpa [#allocation7], 1
    %178 = vsyncpa [#allocation5], 1

</llo_original>
